<compile_context>
chip_gen: v7x
topology: tpu7x:2x2x1
jax: 0.10.0
libtpu: 0.0.40
codegen_flags: <defaults>
</compile_context>

<pallas_src>
import functools

import jax
import jax.numpy as jnp
from jax.experimental import pallas as pl
from jax.experimental.pallas import tpu as pltpu


# --------------------------------------------------------------------------- #
# Kernel
# --------------------------------------------------------------------------- #
def _mlp_kernel(x_ref, w1_ref, b1_ref, w2_ref, b2_ref, w3_ref, b3_ref, o_ref):
    # Layer 1: (TB, OBS) @ (OBS, HID) + (1, HID) -> tanh
    h1 = jnp.tanh(
        jnp.dot(x_ref[...], w1_ref[...], preferred_element_type=jnp.float32)
        + b1_ref[...]
    )
    # Layer 2: (TB, HID) @ (HID, HID) + (1, HID) -> tanh
    h2 = jnp.tanh(
        jnp.dot(h1, w2_ref[...], preferred_element_type=jnp.float32)
        + b2_ref[...]
    )
    # Layer 3: (TB, HID) @ (HID, ACT) + (1, ACT) -> tanh
    out = jnp.tanh(
        jnp.dot(h2, w3_ref[...], preferred_element_type=jnp.float32)
        + b3_ref[...]
    )
    o_ref[...] = out.astype(o_ref.dtype)


# --------------------------------------------------------------------------- #
# Helpers
# --------------------------------------------------------------------------- #
def _round_up(n, m):
    return ((n + m - 1) // m) * m


# --------------------------------------------------------------------------- #
# Wrapper
# --------------------------------------------------------------------------- #
@functools.partial(jax.jit, static_argnames=("tile_b",))
def net_forward(x, params, *, tile_b=1024):
    """x: (B, obs_size) float32.  params: dict of raw (unpadded) weights/biases."""
    B, obs = x.shape
    hid = params["w1"].shape[1]
    act = params["w3"].shape[1]

    # Batch tiling: sublane-align to 8, cap tile at `tile_b` rows, pad the
    # batch with zero rows to a whole number of tiles (inert; sliced off).
    b8 = _round_up(max(B, 8), 8)
    tb = min(tile_b, b8)
    b_pad = _round_up(b8, tb)
    x_p = jnp.pad(x, ((0, b_pad - B), (0, 0)))

    grid = (b_pad // tb,)

    flops = 2 * b_pad * (obs * hid + hid * hid + hid * act)
    transcendentals = b_pad * (2 * hid + act)
    bytes_accessed = 4 * (
        b_pad * obs + b_pad * act
        + obs * hid + hid + hid * hid + hid + hid * act + act
    )

    out = pl.pallas_call(
        _mlp_kernel,
        out_shape=jax.ShapeDtypeStruct((b_pad, act), jnp.float32),
        grid=grid,
        in_specs=[
            # Batch-tiled input (feature dims left at natural size => full-dim blocks).
            pl.BlockSpec((tb, obs), lambda i: (i, 0)),
            # Weights / biases: constant block index -> DMA'd once, VMEM-resident.
            pl.BlockSpec((obs, hid), lambda i: (0, 0)),
            pl.BlockSpec((1, hid), lambda i: (0, 0)),
            pl.BlockSpec((hid, hid), lambda i: (0, 0)),
            pl.BlockSpec((1, hid), lambda i: (0, 0)),
            pl.BlockSpec((hid, act), lambda i: (0, 0)),
            pl.BlockSpec((1, act), lambda i: (0, 0)),
        ],
        out_specs=pl.BlockSpec((tb, act), lambda i: (i, 0)),
        compiler_params=pltpu.CompilerParams(
            dimension_semantics=("parallel",),  # megacore-shards batch on v7x
        ),
        cost_estimate=pl.CostEstimate(
            flops=flops,
            transcendentals=transcendentals,
            bytes_accessed=bytes_accessed,
        ),
    )(
        x_p,
        params["w1"], params["b1"],
        params["w2"], params["b2"],
        params["w3"], params["b3"],
    )
    # Slice back to the logical output shape.
    return out[:B]


# --------------------------------------------------------------------------- #
# Init (mimics torch.nn.Linear default: uniform +-1/sqrt(fan_in))
# --------------------------------------------------------------------------- #
def init_params(key, obs_size, act_size, hid_size=64):
    keys = jax.random.split(key, 6)

    def linear_init(kw, kb, fan_in, fan_out):
        bound = 1.0 / jnp.sqrt(jnp.float32(fan_in))
        w = jax.random.uniform(kw, (fan_in, fan_out), jnp.float32, -bound, bound)
        b = jax.random.uniform(kb, (1, fan_out), jnp.float32, -bound, bound)
        return w, b

    w1, b1 = linear_init(keys[0], keys[1], obs_size, hid_size)
    w2, b2 = linear_init(keys[2], keys[3], hid_size, hid_size)
    w3, b3 = linear_init(keys[4], keys[5], hid_size, act_size)
    return {"w1": w1, "b1": b1, "w2": w2, "b2": b2, "w3": w3, "b3": b3}


def _reference(x, params):
    ref = x
    for wn, bn in (("w1", "b1"), ("w2", "b2"), ("w3", "b3")):
        ref = jnp.tanh(ref @ params[wn] + params[bn])
    return ref


# --------------------------------------------------------------------------- #
# Demo / correctness check
# --------------------------------------------------------------------------- #
if __name__ == "__main__":
    key = jax.random.PRNGKey(0)
    obs_size, act_size, hid_size = 32, 8, 64

    k_params, k_x1, k_x2 = jax.random.split(key, 3)
    params = init_params(k_params, obs_size, act_size, hid_size)

    # Small batch (single grid step, padded to 8 sublanes internally).
    x_small = jax.random.normal(k_x1, (4, obs_size), jnp.float32)
    out_small = jax.block_until_ready(net_forward(x_small, params))
    ref_small = _reference(x_small, params)
    assert out_small.shape == (4, act_size)
    assert jnp.allclose(out_small, ref_small, atol=1e-5, rtol=1e-5)

    # Larger batch with a small tile cap (multi-tile grid, exercises the
    # "parallel" batch axis and the VMEM-resident weight reuse).
    x_large = jax.random.normal(k_x2, (512, obs_size), jnp.float32)
    out_large = jax.block_until_ready(net_forward(x_large, params, tile_b=128))
    ref_large = _reference(x_large, params)
    assert out_large.shape == (512, act_size)
    assert jnp.allclose(out_large, ref_large, atol=1e-5, rtol=1e-5)

    print("KERNEL_OK")
</pallas_src>

<mosaic_0001>
module attributes {stable_mosaic.version = 11 : i64} {
  func.func @_mlp_kernel(%arg0: i32, %arg1: memref<8x32xf32, #tpu.memory_space<vmem>>, %arg2: memref<32x64xf32, #tpu.memory_space<vmem>>, %arg3: memref<1x64xf32, #tpu.memory_space<vmem>>, %arg4: memref<64x64xf32, #tpu.memory_space<vmem>>, %arg5: memref<1x64xf32, #tpu.memory_space<vmem>>, %arg6: memref<64x8xf32, #tpu.memory_space<vmem>>, %arg7: memref<1x8xf32, #tpu.memory_space<vmem>>, %arg8: memref<8x8xf32, #tpu.memory_space<vmem>>) attributes {dimension_semantics = [#tpu.dimension_semantics<parallel>], iteration_bounds = array<i64: 1>, scalar_prefetch = 0 : i64, scratch_operands = 0 : i64, tpu.core_type = #tpu.core_type<tc>, window_params = [{transform_indices = @transform_0, window_bounds = array<i64: 8, 32>}, {pipeline_mode = #tpu.pipeline_mode<synchronous>, transform_indices = @transform_1, window_bounds = array<i64: 32, 64>}, {pipeline_mode = #tpu.pipeline_mode<synchronous>, transform_indices = @transform_2, window_bounds = array<i64: 1, 64>}, {pipeline_mode = #tpu.pipeline_mode<synchronous>, transform_indices = @transform_3, window_bounds = array<i64: 64, 64>}, {pipeline_mode = #tpu.pipeline_mode<synchronous>, transform_indices = @transform_4, window_bounds = array<i64: 1, 64>}, {pipeline_mode = #tpu.pipeline_mode<synchronous>, transform_indices = @transform_5, window_bounds = array<i64: 64, 8>}, {pipeline_mode = #tpu.pipeline_mode<synchronous>, transform_indices = @transform_6, window_bounds = array<i64: 1, 8>}, {transform_indices = @transform_7, window_bounds = array<i64: 8, 8>}]} {
    %c0 = arith.constant 0 : index
    %c0_0 = arith.constant 0 : index
    %0 = vector.load %arg1[%c0, %c0_0] : memref<8x32xf32, #tpu.memory_space<vmem>>, vector<8x32xf32>
    %c0_1 = arith.constant 0 : index
    %c0_2 = arith.constant 0 : index
    %1 = vector.load %arg2[%c0_1, %c0_2] : memref<32x64xf32, #tpu.memory_space<vmem>>, vector<32x64xf32>
    %cst = arith.constant dense<0.000000e+00> : vector<8x64xf32>
    %2 = tpu.matmul %0, %1, %cst {dimension_numbers = #tpu.dot_dimension_numbers<[1], [0], [0], [1], [0, 0, 1, 1], [], []>} : vector<8x32xf32>, vector<32x64xf32>, vector<8x64xf32> -> vector<8x64xf32>
    %c0_3 = arith.constant 0 : index
    %c0_4 = arith.constant 0 : index
    %3 = vector.load %arg3[%c0_3, %c0_4] : memref<1x64xf32, #tpu.memory_space<vmem>>, vector<1x64xf32>
    %4 = vector.broadcast %3 : vector<1x64xf32> to vector<8x64xf32>
    %5 = arith.addf %2, %4 : vector<8x64xf32>
    %6 = math.tanh %5 : vector<8x64xf32>
    %c0_5 = arith.constant 0 : index
    %c0_6 = arith.constant 0 : index
    %7 = vector.load %arg4[%c0_5, %c0_6] : memref<64x64xf32, #tpu.memory_space<vmem>>, vector<64x64xf32>
    %cst_7 = arith.constant dense<0.000000e+00> : vector<8x64xf32>
    %8 = tpu.matmul %6, %7, %cst_7 {dimension_numbers = #tpu.dot_dimension_numbers<[1], [0], [0], [1], [0, 0, 1, 1], [], []>} : vector<8x64xf32>, vector<64x64xf32>, vector<8x64xf32> -> vector<8x64xf32>
    %c0_8 = arith.constant 0 : index
    %c0_9 = arith.constant 0 : index
    %9 = vector.load %arg5[%c0_8, %c0_9] : memref<1x64xf32, #tpu.memory_space<vmem>>, vector<1x64xf32>
    %10 = vector.broadcast %9 : vector<1x64xf32> to vector<8x64xf32>
    %11 = arith.addf %8, %10 : vector<8x64xf32>
    %12 = math.tanh %11 : vector<8x64xf32>
    %c0_10 = arith.constant 0 : index
    %c0_11 = arith.constant 0 : index
    %13 = vector.load %arg6[%c0_10, %c0_11] : memref<64x8xf32, #tpu.memory_space<vmem>>, vector<64x8xf32>
    %cst_12 = arith.constant dense<0.000000e+00> : vector<8x8xf32>
    %14 = tpu.matmul %12, %13, %cst_12 {dimension_numbers = #tpu.dot_dimension_numbers<[1], [0], [0], [1], [0, 0, 1, 1], [], []>} : vector<8x64xf32>, vector<64x8xf32>, vector<8x8xf32> -> vector<8x8xf32>
    %c0_13 = arith.constant 0 : index
    %c0_14 = arith.constant 0 : index
    %15 = vector.load %arg7[%c0_13, %c0_14] : memref<1x8xf32, #tpu.memory_space<vmem>>, vector<1x8xf32>
    %16 = vector.broadcast %15 : vector<1x8xf32> to vector<8x8xf32>
    %17 = arith.addf %14, %16 : vector<8x8xf32>
    %18 = math.tanh %17 : vector<8x8xf32>
    %c0_15 = arith.constant 0 : index
    %c0_16 = arith.constant 0 : index
    %19 = vector.load %arg8[%c0_15, %c0_16] : memref<8x8xf32, #tpu.memory_space<vmem>>, vector<8x8xf32>
    tpu.vector_store %arg8[%c0_15, %c0_16], %18 {strides = array<i32>} : memref<8x8xf32, #tpu.memory_space<vmem>>, vector<8x8xf32>,
    return
  }
  func.func @transform_0(%arg0: i32) -> (i32, i32) {
    %c0_i32 = arith.constant 0 : i32
    %c0_i32_0 = arith.constant 0 : i32
    return %arg0, %c0_i32 : i32, i32
  }
  func.func @transform_1(%arg0: i32) -> (i32, i32) {
    %c0_i32 = arith.constant 0 : i32
    %c0_i32_0 = arith.constant 0 : i32
    %c0_i32_1 = arith.constant 0 : i32
    return %c0_i32, %c0_i32_0 : i32, i32
  }
  func.func @transform_2(%arg0: i32) -> (i32, i32) {
    %c0_i32 = arith.constant 0 : i32
    %c0_i32_0 = arith.constant 0 : i32
    %c0_i32_1 = arith.constant 0 : i32
    return %c0_i32, %c0_i32_0 : i32, i32
  }
  func.func @transform_3(%arg0: i32) -> (i32, i32) {
    %c0_i32 = arith.constant 0 : i32
    %c0_i32_0 = arith.constant 0 : i32
    %c0_i32_1 = arith.constant 0 : i32
    return %c0_i32, %c0_i32_0 : i32, i32
  }
  func.func @transform_4(%arg0: i32) -> (i32, i32) {
    %c0_i32 = arith.constant 0 : i32
    %c0_i32_0 = arith.constant 0 : i32
    %c0_i32_1 = arith.constant 0 : i32
    return %c0_i32, %c0_i32_0 : i32, i32
  }
  func.func @transform_5(%arg0: i32) -> (i32, i32) {
    %c0_i32 = arith.constant 0 : i32
    %c0_i32_0 = arith.constant 0 : i32
    %c0_i32_1 = arith.constant 0 : i32
    return %c0_i32, %c0_i32_0 : i32, i32
  }
  func.func @transform_6(%arg0: i32) -> (i32, i32) {
    %c0_i32 = arith.constant 0 : i32
    %c0_i32_0 = arith.constant 0 : i32
    %c0_i32_1 = arith.constant 0 : i32
    return %c0_i32, %c0_i32_0 : i32, i32
  }
  func.func @transform_7(%arg0: i32) -> (i32, i32) {
    %c0_i32 = arith.constant 0 : i32
    %c0_i32_0 = arith.constant 0 : i32
    return %arg0, %c0_i32 : i32, i32
  }
}

</mosaic_0001>

<llo_original>
// kernel: net_forward.1
$region0: #{net_forward.1}
  #allocation0 [shape = 'u32[]', space=smem, size = 0x4, offset = 0x4, fixed_abs, tag = 'smem constant byte address 0x4 - core index']
  #allocation1 [shape = 'u32[144,128]{1,0:T(1,128)}', space=vmem, size = 0x12000, scoped, tag = 'internal scratch']
  %s0 = inlined_call_operand.vmem [shape: f32[8,32], index: 0, kind: input, shape index: {}]
  %s1 = inlined_call_operand.vmem [shape: f32[32,64], index: 1, kind: input, shape index: {}]
  %s2 = inlined_call_operand.vmem [shape: f32[1,64], index: 2, kind: input, shape index: {}]
  %s3 = inlined_call_operand.vmem [shape: f32[64,64], index: 3, kind: input, shape index: {}]
  %s4 = inlined_call_operand.vmem [shape: f32[1,64], index: 4, kind: input, shape index: {}]
  %s5 = inlined_call_operand.vmem [shape: f32[64,8], index: 5, kind: input, shape index: {}]
  %s6 = inlined_call_operand.vmem [shape: f32[1,8], index: 6, kind: input, shape index: {}]
  %s7 = inlined_call_operand.vmem [shape: f32[8,8], index: 7, kind: output, shape index: {}]
  %s8 = sld [smem:[#allocation0]]
  $region38: #{net_forward.1} parent=0
    _
  %s10 = ssub.s32 1, %s8
  %s11 = scalar_select 0, %s10, %s8
  // Predicated region
  $region2: #{net_forward.1} parent=0 // pred_check
    _
  $region3: #{net_forward.1} parent=0 // pred_check_branch
    %13 = sbr.rel (0) target = $region5
  $region4: #{net_forward.1} parent=0 // pred_region
    _
  $region5: #{net_forward.1} parent=0 // pred_fallthru
    _
  // Predicated region
  $region6: #{net_forward.1} parent=0 // pred_check
    _
  $region7: #{net_forward.1} parent=0 // pred_check_branch
    %15 = sbr.rel (0) target = $region9
  $region8: #{net_forward.1} parent=0 // pred_region
    _
  $region9: #{net_forward.1} parent=0 // pred_fallthru
    _
  // Predicated region
  $region10: #{net_forward.1} parent=0 // pred_check
    _
  $region11: #{net_forward.1} parent=0 // pred_check_branch
    %17 = sbr.rel (0) target = $region13
  $region12: #{net_forward.1} parent=0 // pred_region
    _
  $region13: #{net_forward.1} parent=0 // pred_fallthru
    _
  // Predicated region
  $region14: #{net_forward.1} parent=0 // pred_check
    _
  $region15: #{net_forward.1} parent=0 // pred_check_branch
    %19 = sbr.rel (0) target = $region17
  $region16: #{net_forward.1} parent=0 // pred_region
    _
  $region17: #{net_forward.1} parent=0 // pred_fallthru
    _
  // Predicated region
  $region18: #{net_forward.1} parent=0 // pred_check
    _
  $region19: #{net_forward.1} parent=0 // pred_check_branch
    %21 = sbr.rel (0) target = $region21
  $region20: #{net_forward.1} parent=0 // pred_region
    _
  $region21: #{net_forward.1} parent=0 // pred_fallthru
    _
  // Predicated region
  $region22: #{net_forward.1} parent=0 // pred_check
    _
  $region23: #{net_forward.1} parent=0 // pred_check_branch
    %23 = sbr.rel (0) target = $region25
  $region24: #{net_forward.1} parent=0 // pred_region
    _
  $region25: #{net_forward.1} parent=0 // pred_fallthru
    _
  // Predicated region
  $region26: #{net_forward.1} parent=0 // pred_check
    _
  $region27: #{net_forward.1} parent=0 // pred_check_branch
    %25 = sbr.rel (0) target = $region29
  $region28: #{net_forward.1} parent=0 // pred_region
    _
  $region29: #{net_forward.1} parent=0 // pred_fallthru
    _
  %v26 = vld [vmem:[%s0] sm:$0xff]
  %v27 = vld [vmem:[%s1] sm:$0xff]
  %v28 = vld [vmem:[%s1 + $0x8] sm:$0xff]
  %v29 = vld [vmem:[%s1 + $0x10] sm:$0xff]
  %v30 = vld [vmem:[%s1 + $0x18] sm:$0xff]
  %v31 = vld [vmem:[%s2] sm:$0x1]
  %v33 = vlaneseq
  %v34 = vshrl.u32 %v33, 7
  %v35 = vsub.s32 0, %v34
  %v36 = vrot.slane %v31, %v35
  %vm38 = vcmask 261120
  %v40 = vsel %vm38, %v26, 0
  %42 = vmatprep.subr.mxu0 0.0
  %43 = vmatpush1.msra.mxu0 %v27
  %44 = vmatprep.subr.mxu0 0.0
  %45 = vmatpush1.msra.mxu0 %v28
  %46 = vmatprep.subr.mxu0 0.0
  %47 = vmatpush1.msra.mxu0 %v29
  %48 = vmatprep.subr.mxu0 0.0
  %49 = vmatpush1.msra.mxu0 %v30
  %50 = vmatprep.subr.mxu0 0.0
  %51 = vmatpush1.msra.mxu0 0.0
  %52 = vmatprep.subr.mxu0 0.0
  %53 = vmatpush1.msra.mxu0 0.0
  %54 = vmatprep.subr.mxu0 0.0
  %55 = vmatpush1.msra.mxu0 0.0
  %56 = vmatprep.subr.mxu0 0.0
  %57 = vmatpush1.msra.mxu0 0.0
  %58 = vmatprep.subr.mxu0 0.0
  %59 = vmatpush1.msra.mxu0 0.0
  %60 = vmatprep.subr.mxu0 0.0
  %61 = vmatpush1.msra.mxu0 0.0
  %62 = vmatprep.subr.mxu0 0.0
  %63 = vmatpush1.msra.mxu0 0.0
  %64 = vmatprep.subr.mxu0 0.0
  %65 = vmatpush1.msra.mxu0 0.0
  %66 = vmatprep.subr.mxu0 0.0
  %67 = vmatpush1.msra.mxu0 0.0
  %68 = vmatprep.subr.mxu0 0.0
  %69 = vmatpush1.msra.mxu0 0.0
  %70 = vmatprep.subr.mxu0 0.0
  %71 = vmatpush1.msra.mxu0 0.0
  %72 = vmatprep.subr.mxu0 0.0
  %73 = vmatpush1.msra.mxu0 0.0
  %74 = vmatprep.subr.mxu0 0.0
  %75 = vmatpush1.msra.mxu0 0.0
  %76 = vmatprep.subr.mxu0 0.0
  %77 = vmatpush1.msra.mxu0 0.0
  %78 = vmatprep.subr.mxu0 0.0
  %79 = vmatpush1.msra.mxu0 0.0
  %80 = vmatprep.subr.mxu0 0.0
  %81 = vmatpush1.msra.mxu0 0.0
  %82 = vmatprep.subr.mxu0 0.0
  %83 = vmatpush1.msra.mxu0 0.0
  %84 = vmatprep.subr.mxu0 0.0
  %85 = vmatpush1.msra.mxu0 0.0
  %86 = vmatprep.subr.mxu0 0.0
  %87 = vmatpush1.msra.mxu0 0.0
  %88 = vmatprep.subr.mxu0 0.0
  %89 = vmatpush1.msra.mxu0 0.0
  %90 = vmatprep.subr.mxu0 0.0
  %91 = vmatpush1.msra.mxu0 0.0
  %92 = vmatprep.subr.mxu0 0.0
  %93 = vmatpush1.msra.mxu0 0.0
  %94 = vmatprep.subr.mxu0 0.0
  %95 = vmatpush1.msra.mxu0 0.0
  %96 = vmatprep.subr.mxu0 0.0
  %97 = vmatpush1.msra.mxu0 0.0
  %98 = vmatprep.subr.mxu0 0.0
  %99 = vmatpush1.msra.mxu0 0.0
  %100 = vmatprep.subr.mxu0 0.0
  %101 = vmatpush1.msra.mxu0 0.0
  %102 = vmatprep.subr.mxu0 0.0
  %103 = vmatpush1.msra.mxu0 0.0
  %104 = vmatprep.subr.mxu0 0.0
  %105 = vmatpush1.msra.mxu0 0.0
  %106 = vmatprep.mubr.f32.mxu0 0.0
  %107 = vmatmul.mubr.f32.gmra.mrb[0].mxu0 %v40
  %v108 = vpop.f32.mrb[0].mxu0
  %v109 = vadd.f32 %v36, %v108
  %v110 = vpop.f32.mrb[0].mxu0
  %111 = vdwg.mxu0
  %v112 = vtanh.pop %v109
  %v113 = vld [vmem:[%s3] sm:$0xff]
  %v114 = vld [vmem:[%s3 + $0x8] sm:$0xff]
  %v115 = vld [vmem:[%s3 + $0x10] sm:$0xff]
  %v116 = vld [vmem:[%s3 + $0x18] sm:$0xff]
  %v117 = vld [vmem:[%s3 + $0x20] sm:$0xff]
  %v118 = vld [vmem:[%s3 + $0x28] sm:$0xff]
  %v119 = vld [vmem:[%s3 + $0x30] sm:$0xff]
  %v120 = vld [vmem:[%s3 + $0x38] sm:$0xff]
  %v121 = vld [vmem:[%s4] sm:$0x1]
  %v123 = vlaneseq
  %v124 = vshrl.u32 %v123, 7
  %v125 = vsub.s32 0, %v124
  %v126 = vrot.slane %v121, %v125
  %vm128 = vcmask 523264
  %v130 = vsel %vm128, %v112, 0
  %132 = vmatprep.subr.mxu0 0.0
  %133 = vmatpush1.msra.mxu0 %v113
  %134 = vmatprep.subr.mxu0 0.0
  %135 = vmatpush1.msra.mxu0 %v114
  %136 = vmatprep.subr.mxu0 0.0
  %137 = vmatpush1.msra.mxu0 %v115
  %138 = vmatprep.subr.mxu0 0.0
  %139 = vmatpush1.msra.mxu0 %v116
  %140 = vmatprep.subr.mxu0 0.0
  %141 = vmatpush1.msra.mxu0 %v117
  %142 = vmatprep.subr.mxu0 0.0
  %143 = vmatpush1.msra.mxu0 %v118
  %144 = vmatprep.subr.mxu0 0.0
  %145 = vmatpush1.msra.mxu0 %v119
  %146 = vmatprep.subr.mxu0 0.0
  %147 = vmatpush1.msra.mxu0 %v120
  %148 = vmatprep.subr.mxu0 0.0
  %149 = vmatpush1.msra.mxu0 0.0
  %150 = vmatprep.subr.mxu0 0.0
  %151 = vmatpush1.msra.mxu0 0.0
  %152 = vmatprep.subr.mxu0 0.0
  %153 = vmatpush1.msra.mxu0 0.0
  %154 = vmatprep.subr.mxu0 0.0
  %155 = vmatpush1.msra.mxu0 0.0
  %156 = vmatprep.subr.mxu0 0.0
  %157 = vmatpush1.msra.mxu0 0.0
  %158 = vmatprep.subr.mxu0 0.0
  %159 = vmatpush1.msra.mxu0 0.0
  %160 = vmatprep.subr.mxu0 0.0
  %161 = vmatpush1.msra.mxu0 0.0
  %162 = vmatprep.subr.mxu0 0.0
  %163 = vmatpush1.msra.mxu0 0.0
  %164 = vmatprep.subr.mxu0 0.0
  %165 = vmatpush1.msra.mxu0 0.0
  %166 = vmatprep.subr.mxu0 0.0
  %167 = vmatpush1.msra.mxu0 0.0
  %168 = vmatprep.subr.mxu0 0.0
  %169 = vmatpush1.msra.mxu0 0.0
  %170 = vmatprep.subr.mxu0 0.0
  %171 = vmatpush1.msra.mxu0 0.0
  %172 = vmatprep.subr.mxu0 0.0
  %173 = vmatpush1.msra.mxu0 0.0
  %174 = vmatprep.subr.mxu0 0.0
  %175 = vmatpush1.msra.mxu0 0.0
  %176 = vmatprep.subr.mxu0 0.0
  %177 = vmatpush1.msra.mxu0 0.0
  %178 = vmatprep.subr.mxu0 0.0
  %179 = vmatpush1.msra.mxu0 0.0
  %180 = vmatprep.subr.mxu0 0.0
  %181 = vmatpush1.msra.mxu0 0.0
  %182 = vmatprep.subr.mxu0 0.0
  %183 = vmatpush1.msra.mxu0 0.0
  %184 = vmatprep.subr.mxu0 0.0
  %185 = vmatpush1.msra.mxu0 0.0
  %186 = vmatprep.subr.mxu0 0.0
  %187 = vmatpush1.msra.mxu0 0.0
  %188 = vmatprep.subr.mxu0 0.0
  %189 = vmatpush1.msra.mxu0 0.0
  %190 = vmatprep.subr.mxu0 0.0
  %191 = vmatpush1.msra.mxu0 0.0
  %192 = vmatprep.subr.mxu0 0.0
  %193 = vmatpush1.msra.mxu0 0.0
  %194 = vmatprep.subr.mxu0 0.0
  %195 = vmatpush1.msra.mxu0 0.0
  %196 = vmatprep.mubr.f32.mxu0 0.0
  %197 = vmatmul.mubr.f32.gmra.mrb[0].mxu0 %v130
  %v198 = vpop.f32.mrb[0].mxu0
  %v199 = vadd.f32 %v126, %v198
  %v200 = vpop.f32.mrb[0].mxu0
  %201 = vdwg.mxu0
  %v202 = vtanh.pop %v199
  %v203 = vld [vmem:[%s5] sm:$0xff]
  %v204 = vld [vmem:[%s5 + $0x8] sm:$0xff]
  %v205 = vld [vmem:[%s5 + $0x10] sm:$0xff]
  %v206 = vld [vmem:[%s5 + $0x18] sm:$0xff]
  %v207 = vld [vmem:[%s5 + $0x20] sm:$0xff]
  %v208 = vld [vmem:[%s5 + $0x28] sm:$0xff]
  %v209 = vld [vmem:[%s5 + $0x30] sm:$0xff]
  %v210 = vld [vmem:[%s5 + $0x38] sm:$0xff]
  %v211 = vld [vmem:[%s6] sm:$0x1]
  %v213 = vlaneseq
  %v214 = vshrl.u32 %v213, 7
  %v215 = vsub.s32 0, %v214
  %v216 = vrot.slane %v211, %v215
  %v219 = vsel %vm128, %v202, 0
  %221 = vmatprep.subr.mxu0 0.0
  %222 = vmatpush1.msra.mxu0 %v203
  %223 = vmatprep.subr.mxu0 0.0
  %224 = vmatpush1.msra.mxu0 %v204
  %225 = vmatprep.subr.mxu0 0.0
  %226 = vmatpush1.msra.mxu0 %v205
  %227 = vmatprep.subr.mxu0 0.0
  %228 = vmatpush1.msra.mxu0 %v206
  %229 = vmatprep.subr.mxu0 0.0
  %230 = vmatpush1.msra.mxu0 %v207
  %231 = vmatprep.subr.mxu0 0.0
  %232 = vmatpush1.msra.mxu0 %v208
  %233 = vmatprep.subr.mxu0 0.0
  %234 = vmatpush1.msra.mxu0 %v209
  %235 = vmatprep.subr.mxu0 0.0
  %236 = vmatpush1.msra.mxu0 %v210
  %237 = vmatprep.subr.mxu0 0.0
  %238 = vmatpush1.msra.mxu0 0.0
  %239 = vmatprep.subr.mxu0 0.0
  %240 = vmatpush1.msra.mxu0 0.0
  %241 = vmatprep.subr.mxu0 0.0
  %242 = vmatpush1.msra.mxu0 0.0
  %243 = vmatprep.subr.mxu0 0.0
  %244 = vmatpush1.msra.mxu0 0.0
  %245 = vmatprep.subr.mxu0 0.0
  %246 = vmatpush1.msra.mxu0 0.0
  %247 = vmatprep.subr.mxu0 0.0
  %248 = vmatpush1.msra.mxu0 0.0
  %249 = vmatprep.subr.mxu0 0.0
  %250 = vmatpush1.msra.mxu0 0.0
  %251 = vmatprep.subr.mxu0 0.0
  %252 = vmatpush1.msra.mxu0 0.0
  %253 = vmatprep.subr.mxu0 0.0
  %254 = vmatpush1.msra.mxu0 0.0
  %255 = vmatprep.subr.mxu0 0.0
  %256 = vmatpush1.msra.mxu0 0.0
  %257 = vmatprep.subr.mxu0 0.0
  %258 = vmatpush1.msra.mxu0 0.0
  %259 = vmatprep.subr.mxu0 0.0
  %260 = vmatpush1.msra.mxu0 0.0
  %261 = vmatprep.subr.mxu0 0.0
  %262 = vmatpush1.msra.mxu0 0.0
  %263 = vmatprep.subr.mxu0 0.0
  %264 = vmatpush1.msra.mxu0 0.0
  %265 = vmatprep.subr.mxu0 0.0
  %266 = vmatpush1.msra.mxu0 0.0
  %267 = vmatprep.subr.mxu0 0.0
  %268 = vmatpush1.msra.mxu0 0.0
  %269 = vmatprep.subr.mxu0 0.0
  %270 = vmatpush1.msra.mxu0 0.0
  %271 = vmatprep.subr.mxu0 0.0
  %272 = vmatpush1.msra.mxu0 0.0
  %273 = vmatprep.subr.mxu0 0.0
  %274 = vmatpush1.msra.mxu0 0.0
  %275 = vmatprep.subr.mxu0 0.0
  %276 = vmatpush1.msra.mxu0 0.0
  %277 = vmatprep.subr.mxu0 0.0
  %278 = vmatpush1.msra.mxu0 0.0
  %279 = vmatprep.subr.mxu0 0.0
  %280 = vmatpush1.msra.mxu0 0.0
  %281 = vmatprep.subr.mxu0 0.0
  %282 = vmatpush1.msra.mxu0 0.0
  %283 = vmatprep.subr.mxu0 0.0
  %284 = vmatpush1.msra.mxu0 0.0
  %285 = vmatprep.mubr.f32.mxu0 0.0
  %286 = vmatmul.mubr.f32.gmra.mrb[0].mxu0 %v219
  %v287 = vpop.f32.mrb[0].mxu0
  %v288 = vadd.f32 %v216, %v287
  %v289 = vpop.f32.mrb[0].mxu0
  %290 = vdwg.mxu0
  %v291 = vtanh.pop %v288
  %vm292 = vcmask 64512
  %293 = vst.msk [vmem:[%s7] sm:$0xff] %vm292, %v291
  // Predicated region
  $region30: #{net_forward.1} parent=0 // pred_check
    _
  $region31: #{net_forward.1} parent=0 // pred_check_branch
    %295 = sbr.rel (0) target = $region33
  $region32: #{net_forward.1} parent=0 // pred_region
    _
  $region33: #{net_forward.1} parent=0 // pred_fallthru
    _
  // Predicated region
  $region34: #{net_forward.1} parent=0 // pred_check
    _
  $region35: #{net_forward.1} parent=0 // pred_check_branch
    %297 = sbr.rel (0) target = $region37
  $region36: #{net_forward.1} parent=0 // pred_region
    _
  $region37: #{net_forward.1} parent=0 // pred_fallthru
    _

</llo_original>
